<compile_context>
chip_gen: v5e
topology: v5e:2x2
jax: 0.10.0
libtpu: 0.0.40
codegen_flags: <defaults>
</compile_context>

<pallas_src>
import math

import jax
import jax.numpy as jnp
import numpy as np
from jax.experimental import pallas as pl
from jax.experimental.pallas import tpu as pltpu

HIDDEN = 256              # TIDE.hidden_dim
NUM_GROUPS = 32           # nn.GroupNorm(32, 256)
GN_EPS = 1e-5             # nn.GroupNorm default eps
TILE_HW = 1024            # spatial rows per grid step (keep: ~86% HBM roofline)
RECOMPUTE_CIN_MAX = 256   # recompute-fused conv+GN for levels with Cin <= this
OUT_DTYPE = jnp.bfloat16  # final feature dtype handed to the (external) encoder


# ----------------------------------------------------------------------------
# Tiling / VMEM helpers
# ----------------------------------------------------------------------------
def _grid_cfg(hw, tile_hw):
    """HW tiling: returns (tile, n_outer, n_inner, ragged_last_tile)."""
    if hw <= tile_hw:
        return hw, 1, 1, False
    tile = max(16, (tile_hw // 16) * 16)          # bf16 sublane packing
    n_t = -(-hw // tile)
    # Megacore-friendly split of the HW-tile axis (v7x has 2 TCs; B may be 1).
    n_outer = 2 if n_t % 2 == 0 else 1
    return tile, n_outer, n_t // n_outer, (n_t * tile != hw)


def _vmem_limit(working_set_bytes):
    # Pin the scoped-VMEM budget: above v5e's 16 MiB default (f32 x tiles at
    # Cin=2048 need ~19 MiB double-buffered), well under v7x's 64 MiB physical.
    return int(min(max(32 << 20, 2 * working_set_bytes), 64 << 20))


# ----------------------------------------------------------------------------
# Pallas kernels
# ----------------------------------------------------------------------------
def _make_proj_stats_kernel(tile, n_inner, hw, need_mask, store_y):
    """Conv1x1 (bf16 MXU, f32 acc) + per-channel sum / sum-sq; optional y store."""
    def kernel(x_ref, w_ref, *out_refs):
        if store_y:
            y_ref, s_ref, ss_ref = out_refs
        else:
            s_ref, ss_ref = out_refs
        # Cast to bf16 in-register (no wrapper-side HBM astype pass over x).
        y = jnp.dot(x_ref[0].astype(jnp.bfloat16), w_ref[...],
                    preferred_element_type=jnp.float32)

        @pl.when(pl.program_id(2) == 0)
        def _():
            s_ref[...] = jnp.zeros_like(s_ref)
            ss_ref[...] = jnp.zeros_like(ss_ref)

        if need_mask:
            # Ragged last HW tile: keep garbage rows out of the statistics.
            row0 = (pl.program_id(1) * n_inner + pl.program_id(2)) * tile
            rows = row0 + jax.lax.broadcasted_iota(jnp.int32, (tile, 1), 0)
            ym = jnp.where(rows < hw, y, 0.0)
        else:
            ym = y
        s_ref[0, 0] += jnp.sum(ym, axis=0, keepdims=True)
        ss_ref[0, 0] += jnp.sum(ym * ym, axis=0, keepdims=True)
        if store_y:
            y_ref[0] = y.astype(y_ref.dtype)
    return kernel


def _make_stats_kernel(tile, n_inner, hw, need_mask):
    """Per-channel sum / sum-sq of a pre-computed projection (level-3 conv)."""
    def kernel(y_ref, s_ref, ss_ref):
        y = y_ref[0].astype(jnp.float32)

        @pl.when(pl.program_id(2) == 0)
        def _():
            s_ref[...] = jnp.zeros_like(s_ref)
            ss_ref[...] = jnp.zeros_like(ss_ref)

        if need_mask:
            row0 = (pl.program_id(1) * n_inner + pl.program_id(2)) * tile
            rows = row0 + jax.lax.broadcasted_iota(jnp.int32, (tile, 1), 0)
            y = jnp.where(rows < hw, y, 0.0)
        s_ref[0, 0] += jnp.sum(y, axis=0, keepdims=True)
        ss_ref[0, 0] += jnp.sum(y * y, axis=0, keepdims=True)
    return kernel


def _affine_kernel(y_ref, scale_ref, shift_ref, o_ref):
    # out = y * scale_c + shift_c  (GroupNorm + conv bias folded into scale/shift)
    o_ref[0] = (y_ref[0].astype(jnp.float32) * scale_ref[0]
                + shift_ref[0]).astype(o_ref.dtype)


def _matmul_affine_kernel(x_ref, w_ref, scale_ref, shift_ref, o_ref):
    # Recompute-fused second pass: redo the cheap matmul and apply the affine,
    # writing only the final bf16 output (no y round-trip through HBM).
    y = jnp.dot(x_ref[0].astype(jnp.bfloat16), w_ref[...],
                preferred_element_type=jnp.float32)
    o_ref[0] = (y * scale_ref[0] + shift_ref[0]).astype(o_ref.dtype)


# ----------------------------------------------------------------------------
# Pallas wrappers
# ----------------------------------------------------------------------------
def _proj_stats(x_flat, w_bf, tile_hw, store_y):
    """bf16 matmul + f32 channel stats. Returns (y_bf16 or None, s, ss)."""
    B, HW, Cin = x_flat.shape
    C = w_bf.shape[-1]
    tile, n_o, n_i, need_mask = _grid_cfg(HW, tile_hw)
    kernel = _make_proj_stats_kernel(tile, n_i, HW, need_mask, store_y)

    out_shape, out_specs = [], []
    if store_y:
        out_shape.append(jax.ShapeDtypeStruct((B, HW, C), jnp.bfloat16))
        out_specs.append(pl.BlockSpec((1, tile, C),
                                      lambda b, o, i: (b, o * n_i + i, 0)))
    out_shape += [jax.ShapeDtypeStruct((n_o, B, 1, C), jnp.float32)] * 2
    out_specs += [pl.BlockSpec((1, 1, 1, C), lambda b, o, i: (o, b, 0, 0))] * 2

    vmem = (2 * tile * Cin * x_flat.dtype.itemsize     # x tiles (double-buffered)
            + 2 * Cin * C * 2                          # bf16 weight buffers
            + (2 * tile * C * 2 if store_y else 0)     # bf16 y tiles
            + 4 * C * 4 * 2)                           # s/ss accumulators
    # TODO(synk): pl.Buffered(1) on the (index-constant) weight BlockSpec would
    # save one redundant weight buffer of VMEM; skipped to stay conservative.
    outs = pl.pallas_call(
        kernel,
        out_shape=tuple(out_shape),
        grid=(B, n_o, n_i),
        in_specs=[
            pl.BlockSpec((1, tile, Cin), lambda b, o, i: (b, o * n_i + i, 0)),
            pl.BlockSpec((Cin, C), lambda b, o, i: (0, 0)),
        ],
        out_specs=tuple(out_specs),
        compiler_params=pltpu.CompilerParams(
            dimension_semantics=("parallel", "parallel", "arbitrary"),
            vmem_limit_bytes=_vmem_limit(vmem)),
    )(x_flat, w_bf)

    if store_y:
        y, s, ss = outs
    else:
        (s, ss), y = outs, None
    return y, jnp.sum(s, axis=0)[:, 0, :], jnp.sum(ss, axis=0)[:, 0, :]


def _channel_stats(y_flat, tile_hw):
    """Per-channel sum / sum-sq of a pre-computed projection (any dtype)."""
    B, HW, C = y_flat.shape
    tile, n_o, n_i, need_mask = _grid_cfg(HW, tile_hw)
    kernel = _make_stats_kernel(tile, n_i, HW, need_mask)
    vmem = 2 * tile * C * y_flat.dtype.itemsize + 4 * C * 4 * 2
    s, ss = pl.pallas_call(
        kernel,
        out_shape=(jax.ShapeDtypeStruct((n_o, B, 1, C), jnp.float32),) * 2,
        grid=(B, n_o, n_i),
        in_specs=[pl.BlockSpec((1, tile, C), lambda b, o, i: (b, o * n_i + i, 0))],
        out_specs=(pl.BlockSpec((1, 1, 1, C), lambda b, o, i: (o, b, 0, 0)),) * 2,
        compiler_params=pltpu.CompilerParams(
            dimension_semantics=("parallel", "parallel", "arbitrary"),
            vmem_limit_bytes=_vmem_limit(vmem)),
    )(y_flat)
    return jnp.sum(s, axis=0)[:, 0, :], jnp.sum(ss, axis=0)[:, 0, :]


def _affine(y_flat, scale, shift, tile_hw, out_dtype=OUT_DTYPE):
    """out = y * scale + shift, tiled over HW, exact (un-padded) bf16 output."""
    B, HW, C = y_flat.shape
    tile, n_o, n_i, _ = _grid_cfg(HW, tile_hw)
    n_t = n_o * n_i
    vmem = (2 * tile * C * (y_flat.dtype.itemsize + jnp.dtype(out_dtype).itemsize)
            + 4 * C * 4)
    return pl.pallas_call(
        _affine_kernel,
        out_shape=jax.ShapeDtypeStruct((B, HW, C), out_dtype),
        grid=(B, n_t),
        in_specs=[
            pl.BlockSpec((1, tile, C), lambda b, t: (b, t, 0)),
            pl.BlockSpec((1, 1, C), lambda b, t: (b, 0, 0)),
            pl.BlockSpec((1, 1, C), lambda b, t: (b, 0, 0)),
        ],
        out_specs=pl.BlockSpec((1, tile, C), lambda b, t: (b, t, 0)),
        compiler_params=pltpu.CompilerParams(
            dimension_semantics=("parallel", "parallel"),
            vmem_limit_bytes=_vmem_limit(vmem)),
    )(y_flat, scale, shift)


def _matmul_affine(x_flat, w_bf, scale, shift, tile_hw, out_dtype=OUT_DTYPE):
    """Recompute-fused pass 2: matmul + affine, writing only bf16 output."""
    B, HW, Cin = x_flat.shape
    C = w_bf.shape[-1]
    tile, n_o, n_i, _ = _grid_cfg(HW, tile_hw)
    n_t = n_o * n_i
    vmem = (2 * tile * Cin * x_flat.dtype.itemsize + 2 * Cin * C * 2
            + 2 * tile * C * 2 + 4 * C * 4)
    return pl.pallas_call(
        _matmul_affine_kernel,
        out_shape=jax.ShapeDtypeStruct((B, HW, C), out_dtype),
        grid=(B, n_t),
        in_specs=[
            pl.BlockSpec((1, tile, Cin), lambda b, t: (b, t, 0)),
            pl.BlockSpec((Cin, C), lambda b, t: (0, 0)),
            pl.BlockSpec((1, 1, C), lambda b, t: (b, 0, 0)),
            pl.BlockSpec((1, 1, C), lambda b, t: (b, 0, 0)),
        ],
        out_specs=pl.BlockSpec((1, tile, C), lambda b, t: (b, t, 0)),
        compiler_params=pltpu.CompilerParams(
            dimension_semantics=("parallel", "parallel"),
            vmem_limit_bytes=_vmem_limit(vmem)),
    )(x_flat, w_bf, scale, shift)


def _gn_scale_shift(s, ss, hw, bias, gamma, beta):
    """Tiny per-(B, C) glue: fold the conv bias + GroupNorm into scale/shift."""
    # TODO(synk): E[y^2]-E[y]^2 in f32 can lose precision if group means are
    # large vs std with real pretrained weights; a Welford combine would be safer.
    B, C = s.shape
    cs = C // NUM_GROUPS
    n = float(hw * cs)
    sb = s + hw * bias                         # stats of (y + bias), analytically
    ssb = ss + 2.0 * bias * s + hw * bias * bias
    sg = jnp.sum(sb.reshape(B, NUM_GROUPS, cs), axis=-1)     # (B, G)
    ssg = jnp.sum(ssb.reshape(B, NUM_GROUPS, cs), axis=-1)
    mean_g = sg / n
    var_g = ssg / n - mean_g * mean_g
    inv_g = jax.lax.rsqrt(var_g + GN_EPS)
    mean_c = jnp.repeat(mean_g, cs, axis=1)                  # (B, C)
    inv_c = jnp.repeat(inv_g, cs, axis=1)
    scale = gamma * inv_c                                    # (B, C)
    shift = beta + (bias - mean_c) * scale                   # (B, C)
    return (scale[:, None, :].astype(jnp.float32),
            shift[:, None, :].astype(jnp.float32))


def proj_gn(x_flat, w, bias, gamma, beta, tile_hw=TILE_HW, out_dtype=OUT_DTYPE):
    """Fused Conv1x1(Cin->C) + GroupNorm(32, C): (B, HW, Cin) -> (B, HW, C)."""
    B, HW, Cin = x_flat.shape
    w_bf = w.astype(jnp.bfloat16)              # tiny one-time weight cast
    recompute = Cin <= RECOMPUTE_CIN_MAX       # store-y cheaper for Cin >= 512
    y, s, ss = _proj_stats(x_flat, w_bf, tile_hw, store_y=not recompute)
    scale, shift = _gn_scale_shift(s, ss, HW, bias, gamma, beta)
    if recompute:
        return _matmul_affine(x_flat, w_bf, scale, shift, tile_hw, out_dtype)
    return _affine(y, scale, shift, tile_hw, out_dtype)


# ----------------------------------------------------------------------------
# input_proj wrappers
# ----------------------------------------------------------------------------
def input_proj_1x1_gn(feat, p, tile_hw=TILE_HW):
    B, H, W, Cin = feat.shape
    y = proj_gn(feat.reshape(B, H * W, Cin), p["w"], p["b"], p["gamma"], p["beta"],
                tile_hw)
    return y.reshape(B, H, W, HIDDEN)


def input_proj_3x3s2_gn(feat, p, tile_hw=TILE_HW):
    # Conv2d(Cin, 256, k=3, s=2, p=1) + GroupNorm(32, 256).
    # TODO(synk): the strided 3x3 conv is executed by XLA's native convolution
    # (no 9x im2col HBM materialization); GroupNorm stats + affine run in Pallas.
    y = jax.lax.conv_general_dilated(
        feat.astype(jnp.bfloat16), p["w"].astype(jnp.bfloat16),
        window_strides=(2, 2), padding=((1, 1), (1, 1)),
        dimension_numbers=("NHWC", "HWIO", "NHWC"),
        preferred_element_type=jnp.float32)
    B, Ho, Wo, C = y.shape
    hw = Ho * Wo
    y_flat = y.reshape(B, hw, C)               # f32, no standalone astype pass
    s, ss = _channel_stats(y_flat, tile_hw)
    scale, shift = _gn_scale_shift(s, ss, hw, p["b"], p["gamma"], p["beta"])
    out = _affine(y_flat, scale, shift, tile_hw)
    return out.reshape(B, Ho, Wo, HIDDEN)


# ----------------------------------------------------------------------------
# PositionEmbeddingSineHW(128, tH=20, tW=20, normalize=True) + mask interp (glue)
# ----------------------------------------------------------------------------
def interpolate_mask_nearest(mask, Ho, Wo):
    # F.interpolate(mask.float(), size=(Ho, Wo), mode='nearest').bool()
    B, Hi, Wi = mask.shape
    hi = (jnp.arange(Ho) * Hi) // Ho
    wi = (jnp.arange(Wo) * Wi) // Wo
    return mask[:, hi][:, :, wi]


def pos_embedding_sine_hw(mask, num_pos_feats=128, temperatureH=20, temperatureW=20):
    scale = 2.0 * math.pi
    not_mask = (~mask).astype(jnp.float32)
    y_embed = jnp.cumsum(not_mask, axis=1)
    x_embed = jnp.cumsum(not_mask, axis=2)
    eps = 1e-6
    y_embed = y_embed / (y_embed[:, -1:, :] + eps) * scale
    x_embed = x_embed / (x_embed[:, :, -1:] + eps) * scale
    dim_tx = jnp.arange(num_pos_feats, dtype=jnp.float32)
    dim_tx = temperatureW ** (2.0 * jnp.floor(dim_tx / 2.0) / num_pos_feats)
    pos_x = x_embed[:, :, :, None] / dim_tx
    dim_ty = jnp.arange(num_pos_feats, dtype=jnp.float32)
    dim_ty = temperatureH ** (2.0 * jnp.floor(dim_ty / 2.0) / num_pos_feats)
    pos_y = y_embed[:, :, :, None] / dim_ty
    B, H, W, _ = pos_x.shape
    pos_x = jnp.stack((jnp.sin(pos_x[..., 0::2]), jnp.cos(pos_x[..., 1::2])), axis=4
                      ).reshape(B, H, W, -1)
    pos_y = jnp.stack((jnp.sin(pos_y[..., 0::2]), jnp.cos(pos_y[..., 1::2])), axis=4
                      ).reshape(B, H, W, -1)
    return jnp.concatenate((pos_y, pos_x), axis=3)     # (B, H, W, 256), NHWC


# ----------------------------------------------------------------------------
# TIDE v1 forward (the TIDE-owned compute of forward() + extend_featlayer())
# ----------------------------------------------------------------------------
def tide_forward_v1(feats, x_mask, params):
    srcs, masks, pos = [], [], []
    for l, feat in enumerate(feats):
        H, W = feat.shape[1], feat.shape[2]
        m = interpolate_mask_nearest(x_mask, H, W)
        p = pos_embedding_sine_hw(m)
        src = input_proj_1x1_gn(feat, params[l])       # input_proj[l]: conv1x1 + GN
        srcs.append(src); masks.append(m); pos.append(p)
    # extra feature level: input_proj[3] = conv3x3 s2 p1 + GN on last backbone feat.
    src = input_proj_3x3s2_gn(feats[-1], params[3])
    # NOTE: like the PyTorch reference, the extra-level mask is nearest-interpolated
    # from the previous (already down-sampled) level's mask, not from x_mask.
    m = interpolate_mask_nearest(masks[-1], src.shape[1], src.shape[2])
    p = pos_embedding_sine_hw(m).astype(src.dtype)
    srcs.append(src); masks.append(m); pos.append(p)
    # TODO(synk): encoder/decoder (and the backbone) are injected external modules
    # with no definition in the reference; forward stops at the TIDE-owned compute.
    return srcs, masks, pos


# ----------------------------------------------------------------------------
# Deterministic parameter init + backbone stub + references for the self-test
# ----------------------------------------------------------------------------
def init_params(key, backbone_channels):
    params = []
    for cin in backbone_channels:                      # conv1x1 + GN levels
        key, k1, k2, k3, k4 = jax.random.split(key, 5)
        params.append(dict(
            w=jax.random.normal(k1, (cin, HIDDEN), jnp.float32) / math.sqrt(cin),
            b=0.02 * jax.random.normal(k2, (1, HIDDEN), jnp.float32),
            gamma=1.0 + 0.1 * jax.random.normal(k3, (1, HIDDEN), jnp.float32),
            beta=0.1 * jax.random.normal(k4, (1, HIDDEN), jnp.float32),
        ))
    cin = backbone_channels[-1]                        # conv3x3 s2 + GN level
    key, k1, k2, k3, k4 = jax.random.split(key, 5)
    params.append(dict(
        w=jax.random.normal(k1, (3, 3, cin, HIDDEN), jnp.float32) / math.sqrt(9 * cin),
        b=0.02 * jax.random.normal(k2, (1, HIDDEN), jnp.float32),
        gamma=1.0 + 0.1 * jax.random.normal(k3, (1, HIDDEN), jnp.float32),
        beta=0.1 * jax.random.normal(k4, (1, HIDDEN), jnp.float32),
    ))
    return params


def backbone_stub(key, B, channels, spatials):
    # stand-in for the injected backbone nn.Module (definition not provided)
    feats = []
    for c, (h, w) in zip(channels, spatials):
        key, k = jax.random.split(key)
        feats.append(jax.random.normal(k, (B, h, w, c), jnp.float32))
    return feats


def _ref_proj_gn_f32(x_flat, w, b, gamma, beta):
    y = jnp.einsum("bnc,cd->bnd", x_flat, w) + b
    B, HW, C = y.shape
    yg = y.reshape(B, HW, NUM_GROUPS, C // NUM_GROUPS)
    mean = yg.mean(axis=(1, 3), keepdims=True)
    var = ((yg - mean) ** 2).mean(axis=(1, 3), keepdims=True)
    yn = ((yg - mean) / jnp.sqrt(var + GN_EPS)).reshape(B, HW, C)
    return yn * gamma + beta


def _ref_proj_gn_matched(x_flat, w, b, gamma, beta, store_y):
    # Mirrors the kernel precision: bf16 MXU matmul (f32 acc), f32 GN statistics,
    # bias folded into the affine, bf16 final output.  store_y=True additionally
    # rounds the un-normalized projection to bf16 before the affine (two-pass path).
    y = jnp.einsum("bnc,cd->bnd", x_flat.astype(jnp.bfloat16),
                   w.astype(jnp.bfloat16), preferred_element_type=jnp.float32)
    B, HW, C = y.shape
    cs = C // NUM_GROUPS
    yb = (y + b).reshape(B, HW, NUM_GROUPS, cs)
    mean = yb.mean(axis=(1, 3), keepdims=True)
    var = ((yb - mean) ** 2).mean(axis=(1, 3), keepdims=True)
    mean_c = jnp.broadcast_to(mean, (B, 1, NUM_GROUPS, cs)).reshape(B, 1, C)
    inv_c = jnp.broadcast_to(jax.lax.rsqrt(var + GN_EPS),
                             (B, 1, NUM_GROUPS, cs)).reshape(B, 1, C)
    scale = gamma * inv_c
    shift = beta + (b - mean_c) * scale
    if store_y:
        y = y.astype(jnp.bfloat16).astype(jnp.float32)
    return (y * scale + shift).astype(jnp.bfloat16)


def _ref_conv3x3s2_gn(feat, p, conv_bf16=False):
    xin = feat.astype(jnp.bfloat16) if conv_bf16 else feat
    win = p["w"].astype(jnp.bfloat16) if conv_bf16 else p["w"]
    y = jax.lax.conv_general_dilated(
        xin, win, window_strides=(2, 2), padding=((1, 1), (1, 1)),
        dimension_numbers=("NHWC", "HWIO", "NHWC"),
        preferred_element_type=jnp.float32)
    B, Ho, Wo, C = y.shape
    yf = (y + p["b"].reshape(1, 1, 1, C)).reshape(B, Ho * Wo, C)
    yg = yf.reshape(B, Ho * Wo, NUM_GROUPS, C // NUM_GROUPS)
    mean = yg.mean(axis=(1, 3), keepdims=True)
    var = ((yg - mean) ** 2).mean(axis=(1, 3), keepdims=True)
    yn = ((yg - mean) / jnp.sqrt(var + GN_EPS)).reshape(B, Ho * Wo, C)
    return (yn * p["gamma"] + p["beta"]).reshape(B, Ho, Wo, C)


if __name__ == "__main__":
    B = 2
    backbone_channels = [128, 256, 512]                # small stand-in for [512,1024,2048]
    spatials = [(16, 16), (8, 8), (4, 4)]

    key = jax.random.PRNGKey(0)
    key, k_img, k_feat, k_param, k_y = jax.random.split(key, 5)

    # image-level inputs (NestedTensor: tensors + padding mask, True = padded)
    x_img = jax.random.normal(k_img, (B, 3, 64, 64), jnp.float32)   # NCHW (backbone stubbed)
    rows = jnp.arange(64)[None, :, None]
    cols = jnp.arange(64)[None, None, :]
    h_valid = jnp.array([64, 48])[:, None, None]
    w_valid = jnp.array([64, 56])[:, None, None]
    x_mask = (rows >= h_valid) | (cols >= w_valid)                  # (B, 64, 64) bool

    y_tokens = jax.random.normal(k_y, (B, 8, 32), jnp.float32)      # prompt tokens (consumed only by the external encoder)

    feats = backbone_stub(k_feat, B, backbone_channels, spatials)   # NHWC features
    params = init_params(k_param, backbone_channels)

    srcs, masks, pos = tide_forward_v1(feats, x_mask, params)
    jax.block_until_ready(srcs)

    f32np = lambda a: np.asarray(jnp.asarray(a, jnp.float32))

    # --- correctness checks -------------------------------------------------
    # level 0 (Cin=128): recompute-fused path
    x0 = feats[0].reshape(B, -1, backbone_channels[0]); p0 = params[0]
    got0 = srcs[0].reshape(B, -1, HIDDEN)
    np.testing.assert_allclose(
        f32np(got0),
        f32np(_ref_proj_gn_matched(x0, p0["w"], p0["b"], p0["gamma"], p0["beta"],
                                   store_y=False)),
        rtol=2e-2, atol=2e-2)
    np.testing.assert_allclose(
        f32np(got0),
        f32np(_ref_proj_gn_f32(x0, p0["w"], p0["b"], p0["gamma"], p0["beta"])),
        rtol=5e-2, atol=5e-2)

    # level 2 (Cin=512): store-y two-pass path
    x2 = feats[2].reshape(B, -1, backbone_channels[2]); p2 = params[2]
    got2 = srcs[2].reshape(B, -1, HIDDEN)
    np.testing.assert_allclose(
        f32np(got2),
        f32np(_ref_proj_gn_matched(x2, p2["w"], p2["b"], p2["gamma"], p2["beta"],
                                   store_y=True)),
        rtol=2e-2, atol=2e-2)
    np.testing.assert_allclose(
        f32np(got2),
        f32np(_ref_proj_gn_f32(x2, p2["w"], p2["b"], p2["gamma"], p2["beta"])),
        rtol=5e-2, atol=5e-2)

    # multi-tile + ragged last tile + megacore split, recompute path
    # (HW=256, tile=48 -> 6 tiles -> outer=2 x inner=3, last tile masked)
    got0_t = proj_gn(x0, p0["w"], p0["b"], p0["gamma"], p0["beta"], tile_hw=48)
    np.testing.assert_allclose(f32np(got0_t), f32np(got0), rtol=1e-2, atol=1e-2)
    # same for the store-y path (HW=64, tile=48 -> 2 tiles, ragged, outer=2)
    got2_t = proj_gn(x2, p2["w"], p2["b"], p2["gamma"], p2["beta"], tile_hw=48)
    np.testing.assert_allclose(f32np(got2_t), f32np(got2), rtol=1e-2, atol=1e-2)

    # level-3 path (XLA strided conv + Pallas GroupNorm)
    np.testing.assert_allclose(
        f32np(srcs[3]),
        f32np(_ref_conv3x3s2_gn(feats[-1], params[3], conv_bf16=True
                                ).astype(jnp.bfloat16)),
        rtol=2e-2, atol=2e-2)
    np.testing.assert_allclose(
        f32np(srcs[3]), f32np(_ref_conv3x3s2_gn(feats[-1], params[3])),
        rtol=5e-2, atol=5e-2)

    assert srcs[0].shape == (B, 16, 16, HIDDEN) and srcs[0].dtype == OUT_DTYPE
    assert srcs[1].shape == (B, 8, 8, HIDDEN)
    assert srcs[2].shape == (B, 4, 4, HIDDEN)
    assert srcs[3].shape == (B, 2, 2, HIDDEN)
    assert pos[0].shape == (B, 16, 16, HIDDEN)
    assert masks[3].shape == (B, 2, 2)

    print("KERNEL_OK")
</pallas_src>

<mosaic_0001>
module attributes {stable_mosaic.version = 11 : i64} {
  func.func @kernel(%arg0: i32, %arg1: i32, %arg2: i32, %arg3: memref<1x256x128xf32, #tpu.memory_space<vmem>>, %arg4: memref<128x256xbf16, #tpu.memory_space<vmem>>, %arg5: memref<1x1x1x256xf32, #tpu.memory_space<vmem>>, %arg6: memref<1x1x1x256xf32, #tpu.memory_space<vmem>>) attributes {dimension_semantics = [#tpu.dimension_semantics<parallel>, #tpu.dimension_semantics<parallel>, #tpu.dimension_semantics<arbitrary>], iteration_bounds = array<i64: 2, 1, 1>, scalar_prefetch = 0 : i64, scratch_operands = 0 : i64, tpu.core_type = #tpu.core_type<tc>, window_params = [{transform_indices = @transform_0, window_bounds = array<i64: 1, 256, 128>}, {pipeline_mode = #tpu.pipeline_mode<synchronous>, transform_indices = @transform_1, window_bounds = array<i64: 128, 256>}, {transform_indices = @transform_2, window_bounds = array<i64: 1, 1, 1, 256>}, {transform_indices = @transform_3, window_bounds = array<i64: 1, 1, 1, 256>}]} {
    %c0 = arith.constant 0 : index
    %c0_0 = arith.constant 0 : index
    %c0_1 = arith.constant 0 : index
    %0 = vector.load %arg3[%c0, %c0_0, %c0_1] : memref<1x256x128xf32, #tpu.memory_space<vmem>>, vector<1x256x128xf32>
    %1 = vector.shape_cast %0 : vector<1x256x128xf32> to vector<256x128xf32>
    %2 = arith.truncf %1 : vector<256x128xf32> to vector<256x128xbf16>
    %c0_2 = arith.constant 0 : index
    %c0_3 = arith.constant 0 : index
    %3 = vector.load %arg4[%c0_2, %c0_3] : memref<128x256xbf16, #tpu.memory_space<vmem>>, vector<128x256xbf16>
    %cst = arith.constant dense<0.000000e+00> : vector<256x256xf32>
    %4 = tpu.matmul %2, %3, %cst {dimension_numbers = #tpu.dot_dimension_numbers<[1], [0], [0], [1], [0, 0, 1, 1], [], []>} : vector<256x128xbf16>, vector<128x256xbf16>, vector<256x256xf32> -> vector<256x256xf32>
    %c0_i32 = arith.constant 0 : i32
    %5 = arith.cmpi eq, %arg2, %c0_i32 : i32
    %6 = arith.extui %5 : i1 to i32
    %c0_i32_4 = arith.constant 0 : i32
    %7 = arith.cmpi ne, %6, %c0_i32_4 : i32
    scf.if %7 {
      %cst_23 = arith.constant 0.000000e+00 : f32
      %25 = vector.broadcast %cst_23 : f32 to vector<1x1x1x256xf32>
      %c0_24 = arith.constant 0 : index
      %c0_25 = arith.constant 0 : index
      %c0_26 = arith.constant 0 : index
      %c0_27 = arith.constant 0 : index
      %26 = vector.load %arg5[%c0_24, %c0_25, %c0_26, %c0_27] : memref<1x1x1x256xf32, #tpu.memory_space<vmem>>, vector<1x1x1x256xf32>
      tpu.vector_store %arg5[%c0_24, %c0_25, %c0_26, %c0_27], %25 {strides = array<i32>} : memref<1x1x1x256xf32, #tpu.memory_space<vmem>>, vector<1x1x1x256xf32>,
      %cst_28 = arith.constant 0.000000e+00 : f32
      %27 = vector.broadcast %cst_28 : f32 to vector<1x1x1x256xf32>
      %c0_29 = arith.constant 0 : index
      %c0_30 = arith.constant 0 : index
      %c0_31 = arith.constant 0 : index
      %c0_32 = arith.constant 0 : index
      %28 = vector.load %arg6[%c0_29, %c0_30, %c0_31, %c0_32] : memref<1x1x1x256xf32, #tpu.memory_space<vmem>>, vector<1x1x1x256xf32>
      tpu.vector_store %arg6[%c0_29, %c0_30, %c0_31, %c0_32], %27 {strides = array<i32>} : memref<1x1x1x256xf32, #tpu.memory_space<vmem>>, vector<1x1x1x256xf32>,
    } else {
    }
    %c0_5 = arith.constant 0 : index
    %c0_6 = arith.constant 0 : index
    %c0_7 = arith.constant 0 : index
    %c0_8 = arith.constant 0 : index
    %8 = vector.load %arg5[%c0_5, %c0_6, %c0_7, %c0_8] : memref<1x1x1x256xf32, #tpu.memory_space<vmem>>, vector<1x1x1x256xf32>
    %9 = vector.shape_cast %8 : vector<1x1x1x256xf32> to vector<1x256xf32>
    %cst_9 = arith.constant dense<0.000000e+00> : vector<256xf32>
    %10 = vector.multi_reduction <add>, %4, %cst_9 [0] : vector<256x256xf32> to vector<256xf32>
    %11 = vector.shape_cast %10 : vector<256xf32> to vector<1x256xf32>
    %12 = arith.addf %9, %11 : vector<1x256xf32>
    %c0_10 = arith.constant 0 : index
    %c0_11 = arith.constant 0 : index
    %c0_12 = arith.constant 0 : index
    %c0_13 = arith.constant 0 : index
    %13 = vector.load %arg5[%c0_10, %c0_11, %c0_12, %c0_13] : memref<1x1x1x256xf32, #tpu.memory_space<vmem>>, vector<1x1x1x256xf32>
    %14 = vector.shape_cast %13 : vector<1x1x1x256xf32> to vector<1x256xf32>
    %15 = vector.shape_cast %12 : vector<1x256xf32> to vector<1x1x1x256xf32>
    tpu.vector_store %arg5[%c0_10, %c0_11, %c0_12, %c0_13], %15 {strides = array<i32>} : memref<1x1x1x256xf32, #tpu.memory_space<vmem>>, vector<1x1x1x256xf32>,
    %c0_14 = arith.constant 0 : index
    %c0_15 = arith.constant 0 : index
    %c0_16 = arith.constant 0 : index
    %c0_17 = arith.constant 0 : index
    %16 = vector.load %arg6[%c0_14, %c0_15, %c0_16, %c0_17] : memref<1x1x1x256xf32, #tpu.memory_space<vmem>>, vector<1x1x1x256xf32>
    %17 = vector.shape_cast %16 : vector<1x1x1x256xf32> to vector<1x256xf32>
    %18 = arith.mulf %4, %4 : vector<256x256xf32>
    %cst_18 = arith.constant dense<0.000000e+00> : vector<256xf32>
    %19 = vector.multi_reduction <add>, %18, %cst_18 [0] : vector<256x256xf32> to vector<256xf32>
    %20 = vector.shape_cast %19 : vector<256xf32> to vector<1x256xf32>
    %21 = arith.addf %17, %20 : vector<1x256xf32>
    %c0_19 = arith.constant 0 : index
    %c0_20 = arith.constant 0 : index
    %c0_21 = arith.constant 0 : index
    %c0_22 = arith.constant 0 : index
    %22 = vector.load %arg6[%c0_19, %c0_20, %c0_21, %c0_22] : memref<1x1x1x256xf32, #tpu.memory_space<vmem>>, vector<1x1x1x256xf32>
    %23 = vector.shape_cast %22 : vector<1x1x1x256xf32> to vector<1x256xf32>
    %24 = vector.shape_cast %21 : vector<1x256xf32> to vector<1x1x1x256xf32>
    tpu.vector_store %arg6[%c0_19, %c0_20, %c0_21, %c0_22], %24 {strides = array<i32>} : memref<1x1x1x256xf32, #tpu.memory_space<vmem>>, vector<1x1x1x256xf32>,
    return
  }
  func.func @transform_0(%arg0: i32, %arg1: i32, %arg2: i32) -> (i32, i32, i32) {
    %c1_i32 = arith.constant 1 : i32
    %0 = arith.muli %arg1, %c1_i32 : i32
    %1 = arith.addi %0, %arg2 : i32
    %c0_i32 = arith.constant 0 : i32
    %c0_i32_0 = arith.constant 0 : i32
    return %arg0, %1, %c0_i32 : i32, i32, i32
  }
  func.func @transform_1(%arg0: i32, %arg1: i32, %arg2: i32) -> (i32, i32) {
    %c0_i32 = arith.constant 0 : i32
    %c0_i32_0 = arith.constant 0 : i32
    %c0_i32_1 = arith.constant 0 : i32
    return %c0_i32, %c0_i32_0 : i32, i32
  }
  func.func @transform_2(%arg0: i32, %arg1: i32, %arg2: i32) -> (i32, i32, i32, i32) {
    %c0_i32 = arith.constant 0 : i32
    %c0_i32_0 = arith.constant 0 : i32
    %c0_i32_1 = arith.constant 0 : i32
    return %arg1, %arg0, %c0_i32, %c0_i32_0 : i32, i32, i32, i32
  }
  func.func @transform_3(%arg0: i32, %arg1: i32, %arg2: i32) -> (i32, i32, i32, i32) {
    %c0_i32 = arith.constant 0 : i32
    %c0_i32_0 = arith.constant 0 : i32
    %c0_i32_1 = arith.constant 0 : i32
    return %arg1, %arg0, %c0_i32, %c0_i32_0 : i32, i32, i32, i32
  }
}

</mosaic_0001>

<llo_original>
// kernel: tpu_custom_call.1
$region0: #{tpu_custom_call.1}
  #allocation0 [shape = 'u32[]', space=smem, size = 0x4, offset = 0x4, fixed_abs, tag = 'smem constant byte address 0x4 - core index']
  #allocation1 [shape = 'u32[72,128]{1,0:T(1,128)}', space=vmem, size = 0x9000, scoped, tag = 'internal scratch']
  %s0 = inlined_call_operand.hbm [shape: f32[2,256,128], index: 0, kind: input, shape index: {}]
  %s1 = inlined_call_operand.hbm [shape: bf16[128,256], index: 1, kind: input, shape index: {}]
  %s2 = inlined_call_operand.hbm [shape: f32[1,2,1,256], index: 2, kind: output, shape index: {0}]
  %s3 = inlined_call_operand.hbm [shape: f32[1,2,1,256], index: 3, kind: output, shape index: {1}]
  %4 = xla_tuple %s2, %s3
  %s5 = sld [smem:[#allocation0]]
  $region61: #{tpu_custom_call.1} parent=0
    _
  %s7 = ssub.s32 1, %s5
  %s8 = scalar_select 0, %s7, %s5
  $region1: #{tpu_custom_call.1} parent=0
    #allocation2 [shape = 'u8[262144]{0}', space=vmem, size = 0x40000, scoped, tag = 'input window, operand 0']
    #allocation3 [shape = 's32[2]{0}', space=sflag, size = 0x8, scoped, tag = 'scoped memory for tpu_custom_call.1']
    #allocation4 [shape = 's32[2]{0}', space=sflag, size = 0x8, scoped, tag = 'scoped memory for tpu_custom_call.1']
    #allocation5 [shape = 'u8[65536]{0}', space=vmem, size = 0x10000, scoped, tag = 'input window, operand 1, single buffered']
    #allocation6 [shape = 's32[1]{0}', space=sflag, size = 0x4, scoped, tag = 'scoped memory for tpu_custom_call.1']
    #allocation7 [shape = 'u8[2048]{0}', space=vmem, size = 0x800, scoped, tag = 'output window, operand 0']
    #allocation8 [shape = 'u8[2048]{0}', space=vmem, size = 0x800, scoped, tag = 'output window, operand 1']
    #allocation9 [shape = 's32[2]{0}', space=sflag, size = 0x8, scoped, tag = 'scoped memory for tpu_custom_call.1']
    %9 = vsyncpa [#allocation3], 0
    %s10 = scalar_lea.sflag [#allocation3], 1
    %11 = vsyncpa %s10, 0
    %12 = vsyncpa [#allocation6], 0
    %13 = vsyncpa [#allocation4], 0
    %s14 = scalar_lea.sflag [#allocation4], 1
    %15 = vsyncpa %s14, 0
    %16 = vsyncpa [#allocation9], 0
    %s17 = scalar_lea.sflag [#allocation9], 1
    %18 = vsyncpa %s17, 0
    loop: start=0, step=1, limit=4
    $region2: #{tpu_custom_call.1} parent=1 // loop_pre_header
      _
    $region3: #{tpu_custom_call.1} parent=1 // loop_header
      %s20 = sphi 0, %s24
      %p21 = scmp.ge.s32.totalorder %s20, 4
      %s27 = sphi 0, %s46
      %s28 = sphi 0, %s42
      %s29 = sphi 0, %s38
      %s30 = sphi 0, %s27
      %s31 = sphi 0, %s28
      %s32 = sphi 0, %s29
      %s33 = sphi 0, %s30
      %s34 = sphi 0, %s31
      %s35 = sphi 0, %s32
      %s53 = sphi 0, %s55
      %s56 = sphi 0, %s53
      %s57 = sphi 0, %s56
      %s73 = sphi 0, %s57
      %s77 = sphi 0, %s77
      %s79 = sphi 0, %s77
      %s80 = sphi 0, %s79
      %s94 = sphi 0, %s80
      %s102 = sphi 0, %s104
      %s105 = sphi 0, %s102
      %s106 = sphi 0, %s105
      %s122 = sphi 0, %s106
      %s130 = sphi 0, %s132
      %s133 = sphi 0, %s130
      %s134 = sphi 0, %s133
      %s150 = sphi 0, %s134
    $region4: #{tpu_custom_call.1} parent=1 // loop_header_branch
      %23 = sbr.rel (%p21) target = $region8
    $region5: #{tpu_custom_call.1} parent=1 // loop_body
      %s25 = ssub.s32 %s20, 1
      %s26 = ssub.s32 %s20, 2
      %s36 = sadd.s32 1, %s29
      %p37 = scmp.ge.s32.totalorder %s36, 1
      %s38 = scalar_select %p37, 0, %s36
      %s39 = sadd.s32 1, %s28
      %s40 = scalar_select %p37, %s39, %s28
      %p41 = scmp.ge.s32.totalorder %s40, 1
      %s42 = scalar_select %p41, 0, %s40
      %s43 = sadd.s32 1, %s27
      %s44 = scalar_select %p41, %s43, %s27
      %p45 = scmp.ge.s32.totalorder %s44, 2
      %s46 = scalar_select %p45, 0, %s44
      %s47 = sadd.s32 %s28, %s29
      %s48 = sadd.s32 %s42, %s38
      %s49 = ssub.s32 %s27, %s46
      %s50 = ssub.s32 %s47, %s48
      %s51 = sor.u32 %s49, %s50
      %p52 = scmp.eq.s32.totalorder %s51, 0
      %s54 = sadd.s32 %s53, 1
      %s55 = scalar_select %p52, %s53, %s54
      %p58 = pneg %p52
      %p59 = scmp.eq.s32.totalorder %s20, 1
      %p60 = por %p58, %p59
      %p61 = scmp.ne.s32.totalorder %s53, %s56
      %p62 = scmp.eq.s32.totalorder %s20, 0
      %p63 = por %p61, %p62
      %p64 = scmp.ne.s32.totalorder %s53, %s56
      %p65 = scmp.eq.s32.totalorder %s25, 1
      %p66 = por %p64, %p65
      %p67 = scmp.ne.s32.totalorder %s56, %s57
      %p68 = scmp.eq.s32.totalorder %s25, 0
      %p69 = por %p67, %p68
      %p70 = scmp.ne.s32.totalorder %s56, %s57
      %p71 = scmp.eq.s32.totalorder %s26, 1
      %p72 = por %p70, %p71
      %p74 = scmp.ne.s32.totalorder %s57, %s73
      %p75 = scmp.eq.s32.totalorder %s26, 0
      %p76 = por %p74, %p75
      %s78 = sadd.s32 %s77, 1
      %p81 = scmp.eq.s32.totalorder %s20, 1
      %p82 = scmp.ne.s32.totalorder %s77, %s79
      %p83 = scmp.eq.s32.totalorder %s20, 0
      %p84 = por %p82, %p83
      %p85 = scmp.ne.s32.totalorder %s77, %s79
      %p86 = scmp.eq.s32.totalorder %s25, 1
      %p87 = por %p85, %p86
      %p88 = scmp.ne.s32.totalorder %s79, %s80
      %p89 = scmp.eq.s32.totalorder %s25, 0
      %p90 = por %p88, %p89
      %p91 = scmp.ne.s32.totalorder %s79, %s80
      %p92 = scmp.eq.s32.totalorder %s26, 1
      %p93 = por %p91, %p92
      %p95 = scmp.ne.s32.totalorder %s80, %s94
      %p96 = scmp.eq.s32.totalorder %s26, 0
      %p97 = por %p95, %p96
      %s98 = ssub.s32 %s28, %s42
      %s99 = ssub.s32 %s27, %s46
      %s100 = sor.u32 %s98, %s99
      %p101 = scmp.eq.s32.totalorder %s100, 0
      %s103 = sadd.s32 %s102, 1
      %s104 = scalar_select %p101, %s102, %s103
      %p107 = pneg %p101
      %p108 = scmp.eq.s32.totalorder %s20, 1
      %p109 = por %p107, %p108
      %p110 = scmp.ne.s32.totalorder %s102, %s105
      %p111 = scmp.eq.s32.totalorder %s20, 0
      %p112 = por %p110, %p111
      %p113 = scmp.ne.s32.totalorder %s102, %s105
      %p114 = scmp.eq.s32.totalorder %s25, 1
      %p115 = por %p113, %p114
      %p116 = scmp.ne.s32.totalorder %s105, %s106
      %p117 = scmp.eq.s32.totalorder %s25, 0
      %p118 = por %p116, %p117
      %p119 = scmp.ne.s32.totalorder %s105, %s106
      %p120 = scmp.eq.s32.totalorder %s26, 1
      %p121 = por %p119, %p120
      %p123 = scmp.ne.s32.totalorder %s106, %s122
      %p124 = scmp.eq.s32.totalorder %s26, 0
      %p125 = por %p123, %p124
      %s126 = ssub.s32 %s28, %s42
      %s127 = ssub.s32 %s27, %s46
      %s128 = sor.u32 %s126, %s127
      %p129 = scmp.eq.s32.totalorder %s128, 0
      %s131 = sadd.s32 %s130, 1
      %s132 = scalar_select %p129, %s130, %s131
      %p135 = pneg %p129
      %p136 = scmp.eq.s32.totalorder %s20, 1
      %p137 = por %p135, %p136
      %p138 = scmp.ne.s32.totalorder %s130, %s133
      %p139 = scmp.eq.s32.totalorder %s20, 0
      %p140 = por %p138, %p139
      %p141 = scmp.ne.s32.totalorder %s130, %s133
      %p142 = scmp.eq.s32.totalorder %s25, 1
      %p143 = por %p141, %p142
      %p144 = scmp.ne.s32.totalorder %s133, %s134
      %p145 = scmp.eq.s32.totalorder %s25, 0
      %p146 = por %p144, %p145
      %p147 = scmp.ne.s32.totalorder %s133, %s134
      %p148 = scmp.eq.s32.totalorder %s26, 1
      %p149 = por %p147, %p148
      %p151 = scmp.ne.s32.totalorder %s134, %s150
      %p152 = scmp.eq.s32.totalorder %s26, 0
      %p153 = por %p151, %p152
      %p154 = scmp.le.s32.totalorder 1, %s20
      %p155 = scmp.lt.s32.totalorder %s20, 3
      %p156 = pnand %p154, %p155
      %p157 = pneg %p156
      // Predicated region
      $region9: #{tpu_custom_call.1} parent=5 // pred_check
        _
      $region10: #{tpu_custom_call.1} parent=5 // pred_check_branch
        %159 = sbr.rel (%p156) target = $region12
      $region11: #{tpu_custom_call.1} parent=5 // pred_region
        %s160 = ssub.s32 %s20, 1
        // Predicated region
        $region13: #{tpu_custom_call.1} parent=11 // pred_check
          %p161 = pneg %p90
        $region14: #{tpu_custom_call.1} parent=11 // pred_check_branch
          %163 = sbr.rel (%p161) target = $region16
        $region15: #{tpu_custom_call.1} parent=11 // pred_region
          %165 = vsyncadd [#allocation6], 0
          %s166 = sshll.u32 %s1, 4
          %s167 = int_to_ptr.hbm [resolvable:$true] %s166
          %s168 = sshll.u32 [#allocation5], 4
          %s169 = int_to_ptr.vmem [resolvable:$true] %s168
          %174 = dma.hbm_to_vmem [thread:$0]  %s167, 2048, %s169, [#allocation6], 128, 128, 8
        $region16: #{tpu_custom_call.1} parent=11 // pred_fallthru
          _
      $region12: #{tpu_custom_call.1} parent=5 // pred_fallthru
        _
      %p175 = scmp.lt.s32.totalorder %s20, 2
      // Predicated region
      $region17: #{tpu_custom_call.1} parent=5 // pred_check
        %p176 = pneg %p175
      $region18: #{tpu_custom_call.1} parent=5 // pred_check_branch
        %178 = sbr.rel (%p176) target = $region20
      $region19: #{tpu_custom_call.1} parent=5 // pred_region
        // Predicated region
        $region21: #{tpu_custom_call.1} parent=19 // pred_check
          %p179 = pneg %p63
        $region22: #{tpu_custom_call.1} parent=19 // pred_check_branch
          %181 = sbr.rel (%p179) target = $region24
        $region23: #{tpu_custom_call.1} parent=19 // pred_region
          %s182 = sand.u32 %s53, 1
          %s183 = scalar_lea.sflag [#allocation3], %s182
          %s184 = sand.u32 %s53, 1
          %s185 = smul.addr %s184, 256
          %s186 = scalar_lea.vmem [#allocation2], %s185
          %s187 = sadd.s32 %s28, %s29
          %s188 = smul.u32 32, %s187
          %190 = vsyncadd %s183, 0
          %s191 = smul.addr %s27, 32
          %s192 = sadd.s32 %s188, %s191
          %s193 = smul.addr %s192, 8
          %s194 = scalar_lea.hbm %s0, %s193
          %s195 = sshll.u32 %s194, 4
          %s196 = int_to_ptr.hbm [resolvable:$true] %s195
          %s197 = sshll.u32 %s186, 4
          %s198 = int_to_ptr.vmem [resolvable:$true] %s197
          %203 = dma.hbm_to_vmem [thread:$0]  %s196, 4096, %s198, %s183, 128, 128, 8
        $region24: #{tpu_custom_call.1} parent=19 // pred_fallthru
          _
      $region20: #{tpu_custom_call.1} parent=5 // pred_fallthru
        _
      %p204 = scmp.le.s32.totalorder 1, %s20
      %p205 = scmp.lt.s32.totalorder %s20, 3
      %p206 = pnand %p204, %p205
      %p207 = pneg %p206
      // Predicated region
      $region25: #{tpu_custom_call.1} parent=5 // pred_check
        _
      $region26: #{tpu_custom_call.1} parent=5 // pred_check_branch
        %209 = sbr.rel (%p206) target = $region28
      $region27: #{tpu_custom_call.1} parent=5 // pred_region
        %s210 = ssub.s32 %s20, 1
        %s211 = sand.u32 %s56, 1
        %s212 = scalar_lea.sflag [#allocation3], %s211
        %s213 = sand.u32 %s56, 1
        %s214 = smul.addr %s213, 256
        %s215 = scalar_lea.vmem [#allocation2], %s214
        // Predicated region
        $region29: #{tpu_custom_call.1} parent=27 // pred_check
          %p216 = pneg %p69
        $region30: #{tpu_custom_call.1} parent=27 // pred_check_branch
          %218 = sbr.rel (%p216) target = $region32
        $region31: #{tpu_custom_call.1} parent=27 // pred_region
          %220 = dma.done %s212, 4096
        $region32: #{tpu_custom_call.1} parent=27 // pred_fallthru
          _
        // Predicated region
        $region33: #{tpu_custom_call.1} parent=27 // pred_check
          %p221 = pneg %p90
        $region34: #{tpu_custom_call.1} parent=27 // pred_check_branch
          %223 = sbr.rel (%p221) target = $region36
        $region35: #{tpu_custom_call.1} parent=27 // pred_region
          %225 = dma.done [#allocation6], 2048
        $region36: #{tpu_custom_call.1} parent=27 // pred_fallthru
          _
        %s226 = sand.u32 %s56, 1
        %s227 = scalar_lea.sflag [#allocation3], %s226
        %s228 = sand.u32 %s56, 1
        %s229 = smul.addr %s228, 256
        %s230 = scalar_lea.vmem [#allocation2], %s229
        %p231 = pneg %p69
        %p232 = pneg %p66
        %p233 = pneg %p90
        %p234 = pneg %p87
        %p235 = pneg %p118
        %p236 = pneg %p115
        %s237 = sand.u32 %s105, 1
        %s238 = scalar_lea.sflag [#allocation4], %s237
        %s239 = sand.u32 %s105, 1
        %s240 = smul.addr %s239, 2
        %s241 = scalar_lea.vmem [#allocation7], %s240
        %p242 = pneg %p146
        %p243 = pneg %p143
        %s244 = sand.u32 %s133, 1
        %s245 = scalar_lea.sflag [#allocation9], %s244
        %s246 = sand.u32 %s133, 1
        %s247 = smul.addr %s246, 2
        %s248 = scalar_lea.vmem [#allocation8], %s247
        %s249 = sadd.s32 %s31, %s32
        %s250 = smul.u32 32, %s249
        %v251 = vld [vmem:[%s215] sm:$0xff]
        %v252 = vld [vmem:[%s215 + $0x8] sm:$0xff]
        %v253 = vld [vmem:[%s215 + $0x10] sm:$0xff]
        %v254 = vld [vmem:[%s215 + $0x18] sm:$0xff]
        %v255 = vld [vmem:[%s215 + $0x20] sm:$0xff]
        %v256 = vld [vmem:[%s215 + $0x28] sm:$0xff]
        %v257 = vld [vmem:[%s215 + $0x30] sm:$0xff]
        %v258 = vld [vmem:[%s215 + $0x38] sm:$0xff]
        %v259 = vld [vmem:[%s215 + $0x40] sm:$0xff]
        %v260 = vld [vmem:[%s215 + $0x48] sm:$0xff]
        %v261 = vld [vmem:[%s215 + $0x50] sm:$0xff]
        %v262 = vld [vmem:[%s215 + $0x58] sm:$0xff]
        %v263 = vld [vmem:[%s215 + $0x60] sm:$0xff]
        %v264 = vld [vmem:[%s215 + $0x68] sm:$0xff]
        %v265 = vld [vmem:[%s215 + $0x70] sm:$0xff]
        %v266 = vld [vmem:[%s215 + $0x78] sm:$0xff]
        %v267 = vld [vmem:[%s215 + $0x80] sm:$0xff]
        %v268 = vld [vmem:[%s215 + $0x88] sm:$0xff]
        %v269 = vld [vmem:[%s215 + $0x90] sm:$0xff]
        %v270 = vld [vmem:[%s215 + $0x98] sm:$0xff]
        %v271 = vld [vmem:[%s215 + $0xa0] sm:$0xff]
        %v272 = vld [vmem:[%s215 + $0xa8] sm:$0xff]
        %v273 = vld [vmem:[%s215 + $0xb0] sm:$0xff]
        %v274 = vld [vmem:[%s215 + $0xb8] sm:$0xff]
        %v275 = vld [vmem:[%s215 + $0xc0] sm:$0xff]
        %v276 = vld [vmem:[%s215 + $0xc8] sm:$0xff]
        %v277 = vld [vmem:[%s215 + $0xd0] sm:$0xff]
        %v278 = vld [vmem:[%s215 + $0xd8] sm:$0xff]
        %v279 = vld [vmem:[%s215 + $0xe0] sm:$0xff]
        %v280 = vld [vmem:[%s215 + $0xe8] sm:$0xff]
        %v281 = vld [vmem:[%s215 + $0xf0] sm:$0xff]
        %v282 = vld [vmem:[%s215 + $0xf8] sm:$0xff]
        %v283 = vpack.c.bf16 %v252, %v251
        %v284 = vpack.c.bf16 %v254, %v253
        %v285 = vpack.c.bf16 %v256, %v255
        %v286 = vpack.c.bf16 %v258, %v257
        %v287 = vpack.c.bf16 %v260, %v259
        %v288 = vpack.c.bf16 %v262, %v261
        %v289 = vpack.c.bf16 %v264, %v263
        %v290 = vpack.c.bf16 %v266, %v265
        %v291 = vpack.c.bf16 %v268, %v267
        %v292 = vpack.c.bf16 %v270, %v269
        %v293 = vpack.c.bf16 %v272, %v271
        %v294 = vpack.c.bf16 %v274, %v273
        %v295 = vpack.c.bf16 %v276, %v275
        %v296 = vpack.c.bf16 %v278, %v277
        %v297 = vpack.c.bf16 %v280, %v279
        %v298 = vpack.c.bf16 %v282, %v281
        %v299 = vld [vmem:[#allocation5] sm:$0xff]
        %v300 = vld [vmem:[#allocation5 + $0x8] sm:$0xff]
        %v301 = vld [vmem:[#allocation5 + $0x10] sm:$0xff]
        %v302 = vld [vmem:[#allocation5 + $0x18] sm:$0xff]
        %v303 = vld [vmem:[#allocation5 + $0x20] sm:$0xff]
        %v304 = vld [vmem:[#allocation5 + $0x28] sm:$0xff]
        %v305 = vld [vmem:[#allocation5 + $0x30] sm:$0xff]
        %v306 = vld [vmem:[#allocation5 + $0x38] sm:$0xff]
        %v307 = vld [vmem:[#allocation5 + $0x40] sm:$0xff]
        %v308 = vld [vmem:[#allocation5 + $0x48] sm:$0xff]
        %v309 = vld [vmem:[#allocation5 + $0x50] sm:$0xff]
        %v310 = vld [vmem:[#allocation5 + $0x58] sm:$0xff]
        %v311 = vld [vmem:[#allocation5 + $0x60] sm:$0xff]
        %v312 = vld [vmem:[#allocation5 + $0x68] sm:$0xff]
        %v313 = vld [vmem:[#allocation5 + $0x70] sm:$0xff]
        %v314 = vld [vmem:[#allocation5 + $0x78] sm:$0xff]
        %v331 = vunpack.c.l.b16 %v299
        %v332 = vunpack.c.h.b16 %v299
        %v333 = vunpack.c.l.b16 %v300
        %v334 = vunpack.c.h.b16 %v300
        %v335 = vunpack.c.l.b16 %v301
        %v336 = vunpack.c.h.b16 %v301
        %v337 = vunpack.c.l.b16 %v302
        %v338 = vunpack.c.h.b16 %v302
        %v339 = vunpack.c.l.b16 %v303
        %v340 = vunpack.c.h.b16 %v303
        %v341 = vunpack.c.l.b16 %v304
        %v342 = vunpack.c.h.b16 %v304
        %v343 = vunpack.c.l.b16 %v305
        %v344 = vunpack.c.h.b16 %v305
        %v345 = vunpack.c.l.b16 %v306
        %v346 = vunpack.c.h.b16 %v306
        %v347 = vunpack.c.l.b16 %v307
        %v348 = vunpack.c.h.b16 %v307
        %v349 = vunpack.c.l.b16 %v308
        %v350 = vunpack.c.h.b16 %v308
        %v351 = vunpack.c.l.b16 %v309
        %v352 = vunpack.c.h.b16 %v309
        %v353 = vunpack.c.l.b16 %v310
        %v354 = vunpack.c.h.b16 %v310
        %v355 = vunpack.c.l.b16 %v311
        %v356 = vunpack.c.h.b16 %v311
        %v357 = vunpack.c.l.b16 %v312
        %v358 = vunpack.c.h.b16 %v312
        %v359 = vunpack.c.l.b16 %v313
        %v360 = vunpack.c.h.b16 %v313
        %v361 = vunpack.c.l.b16 %v314
        %v362 = vunpack.c.h.b16 %v314
        %v363 = vpack.c.b16 %v333, %v331
        %v364 = vpack.c.b16 %v334, %v332
        %v365 = vpack.c.b16 %v337, %v335
        %v366 = vpack.c.b16 %v338, %v336
        %v367 = vpack.c.b16 %v341, %v339
        %v368 = vpack.c.b16 %v342, %v340
        %v369 = vpack.c.b16 %v345, %v343
        %v370 = vpack.c.b16 %v346, %v344
        %v371 = vpack.c.b16 %v349, %v347
        %v372 = vpack.c.b16 %v350, %v348
        %v373 = vpack.c.b16 %v353, %v351
        %v374 = vpack.c.b16 %v354, %v352
        %v375 = vpack.c.b16 %v357, %v355
        %v376 = vpack.c.b16 %v358, %v356
        %v377 = vpack.c.b16 %v361, %v359
        %v378 = vpack.c.b16 %v362, %v360
        %395 = vmatpush.bf16.msra.mxu0 %v377
        %396 = vmatpush.bf16.msra.mxu0 %v375
        %397 = vmatpush.bf16.msra.mxu0 %v373
        %398 = vmatpush.bf16.msra.mxu0 %v371
        %399 = vmatpush.bf16.msra.mxu0 %v369
        %400 = vmatpush.bf16.msra.mxu0 %v367
        %401 = vmatpush.bf16.msra.mxu0 %v365
        %402 = vmatpush.bf16.msra.mxu0 %v363
        %403 = vmatmul.bf16.gmra.mxu0 %v283
        %v404 = vpop.f32.mrf.mxu0
        %v405 = vadd.f32 0.0, %v404
        %v406 = vpop.f32.mrf.mxu0
        %v407 = vadd.f32 0.0, %v406
        %408 = vmatmul.bf16.gmra.mxu0 %v284
        %v409 = vpop.f32.mrf.mxu0
        %v410 = vadd.f32 0.0, %v409
        %v411 = vpop.f32.mrf.mxu0
        %v412 = vadd.f32 0.0, %v411
        %413 = vmatmul.bf16.gmra.mxu0 %v285
        %v414 = vpop.f32.mrf.mxu0
        %v415 = vadd.f32 0.0, %v414
        %v416 = vpop.f32.mrf.mxu0
        %v417 = vadd.f32 0.0, %v416
        %418 = vmatmul.bf16.gmra.mxu0 %v286
        %v419 = vpop.f32.mrf.mxu0
        %v420 = vadd.f32 0.0, %v419
        %v421 = vpop.f32.mrf.mxu0
        %v422 = vadd.f32 0.0, %v421
        %423 = vmatmul.bf16.gmra.mxu0 %v287
        %v424 = vpop.f32.mrf.mxu0
        %v425 = vadd.f32 0.0, %v424
        %v426 = vpop.f32.mrf.mxu0
        %v427 = vadd.f32 0.0, %v426
        %428 = vmatmul.bf16.gmra.mxu0 %v288
        %v429 = vpop.f32.mrf.mxu0
        %v430 = vadd.f32 0.0, %v429
        %v431 = vpop.f32.mrf.mxu0
        %v432 = vadd.f32 0.0, %v431
        %433 = vmatmul.bf16.gmra.mxu0 %v289
        %v434 = vpop.f32.mrf.mxu0
        %v435 = vadd.f32 0.0, %v434
        %v436 = vpop.f32.mrf.mxu0
        %v437 = vadd.f32 0.0, %v436
        %438 = vmatmul.bf16.gmra.mxu0 %v290
        %v439 = vpop.f32.mrf.mxu0
        %v440 = vadd.f32 0.0, %v439
        %v441 = vpop.f32.mrf.mxu0
        %v442 = vadd.f32 0.0, %v441
        %443 = vmatmul.bf16.gmra.mxu0 %v291
        %v444 = vpop.f32.mrf.mxu0
        %v445 = vadd.f32 0.0, %v444
        %v446 = vpop.f32.mrf.mxu0
        %v447 = vadd.f32 0.0, %v446
        %448 = vmatmul.bf16.gmra.mxu0 %v292
        %v449 = vpop.f32.mrf.mxu0
        %v450 = vadd.f32 0.0, %v449
        %v451 = vpop.f32.mrf.mxu0
        %v452 = vadd.f32 0.0, %v451
        %453 = vmatmul.bf16.gmra.mxu0 %v293
        %v454 = vpop.f32.mrf.mxu0
        %v455 = vadd.f32 0.0, %v454
        %v456 = vpop.f32.mrf.mxu0
        %v457 = vadd.f32 0.0, %v456
        %458 = vmatmul.bf16.gmra.mxu0 %v294
        %v459 = vpop.f32.mrf.mxu0
        %v460 = vadd.f32 0.0, %v459
        %v461 = vpop.f32.mrf.mxu0
        %v462 = vadd.f32 0.0, %v461
        %463 = vmatmul.bf16.gmra.mxu0 %v295
        %v464 = vpop.f32.mrf.mxu0
        %v465 = vadd.f32 0.0, %v464
        %v466 = vpop.f32.mrf.mxu0
        %v467 = vadd.f32 0.0, %v466
        %468 = vmatmul.bf16.gmra.mxu0 %v296
        %v469 = vpop.f32.mrf.mxu0
        %v470 = vadd.f32 0.0, %v469
        %v471 = vpop.f32.mrf.mxu0
        %v472 = vadd.f32 0.0, %v471
        %473 = vmatmul.bf16.gmra.mxu0 %v297
        %v474 = vpop.f32.mrf.mxu0
        %v475 = vadd.f32 0.0, %v474
        %v476 = vpop.f32.mrf.mxu0
        %v477 = vadd.f32 0.0, %v476
        %478 = vmatmul.bf16.gmra.mxu0 %v298
        %v479 = vpop.f32.mrf.mxu0
        %v480 = vadd.f32 0.0, %v479
        %v481 = vpop.f32.mrf.mxu0
        %v482 = vadd.f32 0.0, %v481
        %483 = vdwg.mxu0
        %484 = vmatpush.bf16.msra.mxu0 %v378
        %485 = vmatpush.bf16.msra.mxu0 %v376
        %486 = vmatpush.bf16.msra.mxu0 %v374
        %487 = vmatpush.bf16.msra.mxu0 %v372
        %488 = vmatpush.bf16.msra.mxu0 %v370
        %489 = vmatpush.bf16.msra.mxu0 %v368
        %490 = vmatpush.bf16.msra.mxu0 %v366
        %491 = vmatpush.bf16.msra.mxu0 %v364
        %492 = vmatmul.bf16.gmra.mxu0 %v283
        %v493 = vpop.f32.mrf.mxu0
        %v494 = vadd.f32 0.0, %v493
        %v495 = vpop.f32.mrf.mxu0
        %v496 = vadd.f32 0.0, %v495
        %497 = vmatmul.bf16.gmra.mxu0 %v284
        %v498 = vpop.f32.mrf.mxu0
        %v499 = vadd.f32 0.0, %v498
        %v500 = vpop.f32.mrf.mxu0
        %v501 = vadd.f32 0.0, %v500
        %502 = vmatmul.bf16.gmra.mxu0 %v285
        %v503 = vpop.f32.mrf.mxu0
        %v504 = vadd.f32 0.0, %v503
        %v505 = vpop.f32.mrf.mxu0
        %v506 = vadd.f32 0.0, %v505
        %507 = vmatmul.bf16.gmra.mxu0 %v286
        %v508 = vpop.f32.mrf.mxu0
        %v509 = vadd.f32 0.0, %v508
        %v510 = vpop.f32.mrf.mxu0
        %v511 = vadd.f32 0.0, %v510
        %512 = vmatmul.bf16.gmra.mxu0 %v287
        %v513 = vpop.f32.mrf.mxu0
        %v514 = vadd.f32 0.0, %v513
        %v515 = vpop.f32.mrf.mxu0
        %v516 = vadd.f32 0.0, %v515
        %517 = vmatmul.bf16.gmra.mxu0 %v288
        %v518 = vpop.f32.mrf.mxu0
        %v519 = vadd.f32 0.0, %v518
        %v520 = vpop.f32.mrf.mxu0
        %v521 = vadd.f32 0.0, %v520
        %522 = vmatmul.bf16.gmra.mxu0 %v289
        %v523 = vpop.f32.mrf.mxu0
        %v524 = vadd.f32 0.0, %v523
        %v525 = vpop.f32.mrf.mxu0
        %v526 = vadd.f32 0.0, %v525
        %527 = vmatmul.bf16.gmra.mxu0 %v290
        %v528 = vpop.f32.mrf.mxu0
        %v529 = vadd.f32 0.0, %v528
        %v530 = vpop.f32.mrf.mxu0
        %v531 = vadd.f32 0.0, %v530
        %532 = vmatmul.bf16.gmra.mxu0 %v291
        %v533 = vpop.f32.mrf.mxu0
        %v534 = vadd.f32 0.0, %v533
        %v535 = vpop.f32.mrf.mxu0
        %v536 = vadd.f32 0.0, %v535
        %537 = vmatmul.bf16.gmra.mxu0 %v292
        %v538 = vpop.f32.mrf.mxu0
        %v539 = vadd.f32 0.0, %v538
        %v540 = vpop.f32.mrf.mxu0
        %v541 = vadd.f32 0.0, %v540
        %542 = vmatmul.bf16.gmra.mxu0 %v293
        %v543 = vpop.f32.mrf.mxu0
        %v544 = vadd.f32 0.0, %v543
        %v545 = vpop.f32.mrf.mxu0
        %v546 = vadd.f32 0.0, %v545
        %547 = vmatmul.bf16.gmra.mxu0 %v294
        %v548 = vpop.f32.mrf.mxu0
        %v549 = vadd.f32 0.0, %v548
        %v550 = vpop.f32.mrf.mxu0
        %v551 = vadd.f32 0.0, %v550
        %552 = vmatmul.bf16.gmra.mxu0 %v295
        %v553 = vpop.f32.mrf.mxu0
        %v554 = vadd.f32 0.0, %v553
        %v555 = vpop.f32.mrf.mxu0
        %v556 = vadd.f32 0.0, %v555
        %557 = vmatmul.bf16.gmra.mxu0 %v296
        %v558 = vpop.f32.mrf.mxu0
        %v559 = vadd.f32 0.0, %v558
        %v560 = vpop.f32.mrf.mxu0
        %v561 = vadd.f32 0.0, %v560
        %562 = vmatmul.bf16.gmra.mxu0 %v297
        %v563 = vpop.f32.mrf.mxu0
        %v564 = vadd.f32 0.0, %v563
        %v565 = vpop.f32.mrf.mxu0
        %v566 = vadd.f32 0.0, %v565
        %567 = vmatmul.bf16.gmra.mxu0 %v298
        %v568 = vpop.f32.mrf.mxu0
        %v569 = vadd.f32 0.0, %v568
        %v570 = vpop.f32.mrf.mxu0
        %v571 = vadd.f32 0.0, %v570
        %572 = vdwg.mxu0
        %p573 = scmp.eq.s32.totalorder %s32, 0
        // Predicated region
        $region37: #{tpu_custom_call.1} parent=27 // pred_check
          %p574 = pneg %p573
        $region38: #{tpu_custom_call.1} parent=27 // pred_check_branch
          %576 = sbr.rel (%p574) target = $region40
        $region39: #{tpu_custom_call.1} parent=27 // pred_region
          %v577 = vlaneseq
          %vm578 = vcmp.ge.s32.totalorder %v577, 0
          %vm579 = vcmp.lt.s32.totalorder %v577, 256
          %vm580 = vmand %vm578, %vm579
          %581 = vst.msk [vmem:[%s241] sm:$0x3] %vm580, 0.0
          %582 = vst.msk [vmem:[%s248] sm:$0x3] %vm580, 0.0
        $region40: #{tpu_custom_call.1} parent=27 // pred_fallthru
          _
        %v583 = vld [vmem:[%s241] sm:$0x3]
        %v584 = vadd.f32 %v405, %v407
        %v585 = vadd.f32 %v584, %v410
        %v586 = vadd.f32 %v585, %v412
        %v587 = vadd.f32 %v586, %v415
        %v588 = vadd.f32 %v587, %v417
        %v589 = vadd.f32 %v588, %v420
        %v590 = vadd.f32 %v589, %v422
        %v591 = vadd.f32 %v590, %v425
        %v592 = vadd.f32 %v591, %v427
        %v593 = vadd.f32 %v592, %v430
        %v594 = vadd.f32 %v593, %v432
        %v595 = vadd.f32 %v594, %v435
        %v596 = vadd.f32 %v595, %v437
        %v597 = vadd.f32 %v596, %v440
        %v598 = vadd.f32 %v597, %v442
        %v599 = vadd.f32 %v598, %v445
        %v600 = vadd.f32 %v599, %v447
        %v601 = vadd.f32 %v600, %v450
        %v602 = vadd.f32 %v601, %v452
        %v603 = vadd.f32 %v602, %v455
        %v604 = vadd.f32 %v603, %v457
        %v605 = vadd.f32 %v604, %v460
        %v606 = vadd.f32 %v605, %v462
        %v607 = vadd.f32 %v606, %v465
        %v608 = vadd.f32 %v607, %v467
        %v609 = vadd.f32 %v608, %v470
        %v610 = vadd.f32 %v609, %v472
        %v611 = vadd.f32 %v610, %v475
        %v612 = vadd.f32 %v611, %v477
        %v613 = vadd.f32 %v612, %v480
        %v614 = vadd.f32 %v613, %v482
        %v615 = vrot.slane %v614, 4
        %v616 = vadd.f32 %v614, %v615
        %v617 = vrot.slane %v616, 2
        %v618 = vadd.f32 %v616, %v617
        %v619 = vrot.slane %v618, 1
        %v620 = vadd.f32 %v618, %v619
        %v621 = vadd.f32 %v494, %v496
        %v622 = vadd.f32 %v621, %v499
        %v623 = vadd.f32 %v622, %v501
        %v624 = vadd.f32 %v623, %v504
        %v625 = vadd.f32 %v624, %v506
        %v626 = vadd.f32 %v625, %v509
        %v627 = vadd.f32 %v626, %v511
        %v628 = vadd.f32 %v627, %v514
        %v629 = vadd.f32 %v628, %v516
        %v630 = vadd.f32 %v629, %v519
        %v631 = vadd.f32 %v630, %v521
        %v632 = vadd.f32 %v631, %v524
        %v633 = vadd.f32 %v632, %v526
        %v634 = vadd.f32 %v633, %v529
        %v635 = vadd.f32 %v634, %v531
        %v636 = vadd.f32 %v635, %v534
        %v637 = vadd.f32 %v636, %v536
        %v638 = vadd.f32 %v637, %v539
        %v639 = vadd.f32 %v638, %v541
        %v640 = vadd.f32 %v639, %v544
        %v641 = vadd.f32 %v640, %v546
        %v642 = vadd.f32 %v641, %v549
        %v643 = vadd.f32 %v642, %v551
        %v644 = vadd.f32 %v643, %v554
        %v645 = vadd.f32 %v644, %v556
        %v646 = vadd.f32 %v645, %v559
        %v647 = vadd.f32 %v646, %v561
        %v648 = vadd.f32 %v647, %v564
        %v649 = vadd.f32 %v648, %v566
        %v650 = vadd.f32 %v649, %v569
        %v651 = vadd.f32 %v650, %v571
        %v652 = vrot.slane %v651, 4
        %v653 = vadd.f32 %v651, %v652
        %v654 = vrot.slane %v653, 2
        %v655 = vadd.f32 %v653, %v654
        %v656 = vrot.slane %v655, 1
        %v657 = vadd.f32 %v655, %v656
        %v660 = vrot.slane %v657, 7
        %vm661 = vcmask 1040384
        %v662 = vsel %vm661, %v620, %v660
        %v664 = vadd.f32 %v583, %v662
        %v665 = vlaneseq
        %vm666 = vcmp.ge.s32.totalorder %v665, 0
        %vm667 = vcmp.lt.s32.totalorder %v665, 256
        %vm668 = vmand %vm666, %vm667
        %669 = vst.msk [vmem:[%s241] sm:$0x3] %vm668, %v664
        %v670 = vld [vmem:[%s248] sm:$0x3]
        %v671 = vmul.f32 %v405, %v405
        %v672 = vmul.f32 %v494, %v494
        %v673 = vmul.f32 %v407, %v407
        %v674 = vmul.f32 %v496, %v496
        %v675 = vmul.f32 %v410, %v410
        %v676 = vmul.f32 %v499, %v499
        %v677 = vmul.f32 %v412, %v412
        %v678 = vmul.f32 %v501, %v501
        %v679 = vmul.f32 %v415, %v415
        %v680 = vmul.f32 %v504, %v504
        %v681 = vmul.f32 %v417, %v417
        %v682 = vmul.f32 %v506, %v506
        %v683 = vmul.f32 %v420, %v420
        %v684 = vmul.f32 %v509, %v509
        %v685 = vmul.f32 %v422, %v422
        %v686 = vmul.f32 %v511, %v511
        %v687 = vmul.f32 %v425, %v425
        %v688 = vmul.f32 %v514, %v514
        %v689 = vmul.f32 %v427, %v427
        %v690 = vmul.f32 %v516, %v516
        %v691 = vmul.f32 %v430, %v430
        %v692 = vmul.f32 %v519, %v519
        %v693 = vmul.f32 %v432, %v432
        %v694 = vmul.f32 %v521, %v521
        %v695 = vmul.f32 %v435, %v435
        %v696 = vmul.f32 %v524, %v524
        %v697 = vmul.f32 %v437, %v437
        %v698 = vmul.f32 %v526, %v526
        %v699 = vmul.f32 %v440, %v440
        %v700 = vmul.f32 %v529, %v529
        %v701 = vmul.f32 %v442, %v442
        %v702 = vmul.f32 %v531, %v531
        %v703 = vmul.f32 %v445, %v445
        %v704 = vmul.f32 %v534, %v534
        %v705 = vmul.f32 %v447, %v447
        %v706 = vmul.f32 %v536, %v536
        %v707 = vmul.f32 %v450, %v450
        %v708 = vmul.f32 %v539, %v539
        %v709 = vmul.f32 %v452, %v452
        %v710 = vmul.f32 %v541, %v541
        %v711 = vmul.f32 %v455, %v455
        %v712 = vmul.f32 %v544, %v544
        %v713 = vmul.f32 %v457, %v457
        %v714 = vmul.f32 %v546, %v546
        %v715 = vmul.f32 %v460, %v460
        %v716 = vmul.f32 %v549, %v549
        %v717 = vmul.f32 %v462, %v462
        %v718 = vmul.f32 %v551, %v551
        %v719 = vmul.f32 %v465, %v465
        %v720 = vmul.f32 %v554, %v554
        %v721 = vmul.f32 %v467, %v467
        %v722 = vmul.f32 %v556, %v556
        %v723 = vmul.f32 %v470, %v470
        %v724 = vmul.f32 %v559, %v559
        %v725 = vmul.f32 %v472, %v472
        %v726 = vmul.f32 %v561, %v561
        %v727 = vmul.f32 %v475, %v475
        %v728 = vmul.f32 %v564, %v564
        %v729 = vmul.f32 %v477, %v477
        %v730 = vmul.f32 %v566, %v566
        %v731 = vmul.f32 %v480, %v480
        %v732 = vmul.f32 %v569, %v569
        %v733 = vmul.f32 %v482, %v482
        %v734 = vmul.f32 %v571, %v571
        %v735 = vadd.f32 %v671, %v673
        %v736 = vadd.f32 %v735, %v675
        %v737 = vadd.f32 %v736, %v677
        %v738 = vadd.f32 %v737, %v679
        %v739 = vadd.f32 %v738, %v681
        %v740 = vadd.f32 %v739, %v683
        %v741 = vadd.f32 %v740, %v685
        %v742 = vadd.f32 %v741, %v687
        %v743 = vadd.f32 %v742, %v689
        %v744 = vadd.f32 %v743, %v691
        %v745 = vadd.f32 %v744, %v693
        %v746 = vadd.f32 %v745, %v695
        %v747 = vadd.f32 %v746, %v697
        %v748 = vadd.f32 %v747, %v699
        %v749 = vadd.f32 %v748, %v701
        %v750 = vadd.f32 %v749, %v703
        %v751 = vadd.f32 %v750, %v705
        %v752 = vadd.f32 %v751, %v707
        %v753 = vadd.f32 %v752, %v709
        %v754 = vadd.f32 %v753, %v711
        %v755 = vadd.f32 %v754, %v713
        %v756 = vadd.f32 %v755, %v715
        %v757 = vadd.f32 %v756, %v717
        %v758 = vadd.f32 %v757, %v719
        %v759 = vadd.f32 %v758, %v721
        %v760 = vadd.f32 %v759, %v723
        %v761 = vadd.f32 %v760, %v725
        %v762 = vadd.f32 %v761, %v727
        %v763 = vadd.f32 %v762, %v729
        %v764 = vadd.f32 %v763, %v731
        %v765 = vadd.f32 %v764, %v733
        %v766 = vrot.slane %v765, 4
        %v767 = vadd.f32 %v765, %v766
        %v768 = vrot.slane %v767, 2
        %v769 = vadd.f32 %v767, %v768
        %v770 = vrot.slane %v769, 1
        %v771 = vadd.f32 %v769, %v770
        %v772 = vadd.f32 %v672, %v674
        %v773 = vadd.f32 %v772, %v676
        %v774 = vadd.f32 %v773, %v678
        %v775 = vadd.f32 %v774, %v680
        %v776 = vadd.f32 %v775, %v682
        %v777 = vadd.f32 %v776, %v684
        %v778 = vadd.f32 %v777, %v686
        %v779 = vadd.f32 %v778, %v688
        %v780 = vadd.f32 %v779, %v690
        %v781 = vadd.f32 %v780, %v692
        %v782 = vadd.f32 %v781, %v694
        %v783 = vadd.f32 %v782, %v696
        %v784 = vadd.f32 %v783, %v698
        %v785 = vadd.f32 %v784, %v700
        %v786 = vadd.f32 %v785, %v702
        %v787 = vadd.f32 %v786, %v704
        %v788 = vadd.f32 %v787, %v706
        %v789 = vadd.f32 %v788, %v708
        %v790 = vadd.f32 %v789, %v710
        %v791 = vadd.f32 %v790, %v712
        %v792 = vadd.f32 %v791, %v714
        %v793 = vadd.f32 %v792, %v716
        %v794 = vadd.f32 %v793, %v718
        %v795 = vadd.f32 %v794, %v720
        %v796 = vadd.f32 %v795, %v722
        %v797 = vadd.f32 %v796, %v724
        %v798 = vadd.f32 %v797, %v726
        %v799 = vadd.f32 %v798, %v728
        %v800 = vadd.f32 %v799, %v730
        %v801 = vadd.f32 %v800, %v732
        %v802 = vadd.f32 %v801, %v734
        %v803 = vrot.slane %v802, 4
        %v804 = vadd.f32 %v802, %v803
        %v805 = vrot.slane %v804, 2
        %v806 = vadd.f32 %v804, %v805
        %v807 = vrot.slane %v806, 1
        %v808 = vadd.f32 %v806, %v807
        %v811 = vrot.slane %v808, 7
        %v812 = vsel %vm661, %v771, %v811
        %v814 = vadd.f32 %v670, %v812
        %815 = vst.msk [vmem:[%s248] sm:$0x3] %vm668, %v814
        %s816 = sand.u32 %s105, 1
        %s817 = scalar_lea.sflag [#allocation4], %s816
        %s818 = sand.u32 %s105, 1
        %s819 = smul.addr %s818, 2
        %s820 = scalar_lea.vmem [#allocation7], %s819
        %s821 = sand.u32 %s133, 1
        %s822 = scalar_lea.sflag [#allocation9], %s821
        %s823 = sand.u32 %s133, 1
        %s824 = smul.addr %s823, 2
        %s825 = scalar_lea.vmem [#allocation8], %s824
        // Predicated region
        $region41: #{tpu_custom_call.1} parent=27 // pred_check
          %p826 = pneg %p115
        $region42: #{tpu_custom_call.1} parent=27 // pred_check_branch
          %828 = sbr.rel (%p826) target = $region44
        $region43: #{tpu_custom_call.1} parent=27 // pred_region
          %830 = vsyncadd %s817, 0
          %s831 = smul.addr %s30, 2
          %s832 = smul.addr %s31, 4
          %s833 = sadd.s32 %s831, %s832
          %s834 = scalar_lea.hbm %s2, %s833
          %s836 = sshll.u32 %s820, 4
          %s837 = int_to_ptr.vmem [resolvable:$true] %s836
          %s838 = sshll.u32 %s834, 4
          %s839 = int_to_ptr.hbm [resolvable:$true] %s838
          %841 = dma.vmem_to_hbm [thread:$0]  %s837, 32, %s839, %s817
        $region44: #{tpu_custom_call.1} parent=27 // pred_fallthru
          _
        // Predicated region
        $region45: #{tpu_custom_call.1} parent=27 // pred_check
          %p842 = pneg %p143
        $region46: #{tpu_custom_call.1} parent=27 // pred_check_branch
          %844 = sbr.rel (%p842) target = $region48
        $region47: #{tpu_custom_call.1} parent=27 // pred_region
          %846 = vsyncadd %s822, 0
          %s847 = smul.addr %s30, 2
          %s848 = smul.addr %s31, 4
          %s849 = sadd.s32 %s847, %s848
          %s850 = scalar_lea.hbm %s3, %s849
          %s852 = sshll.u32 %s825, 4
          %s853 = int_to_ptr.vmem [resolvable:$true] %s852
          %s854 = sshll.u32 %s850, 4
          %s855 = int_to_ptr.hbm [resolvable:$true] %s854
          %857 = dma.vmem_to_hbm [thread:$0]  %s853, 32, %s855, %s822
        $region48: #{tpu_custom_call.1} parent=27 // pred_fallthru
          _
      $region28: #{tpu_custom_call.1} parent=5 // pred_fallthru
        _
      %p858 = scmp.le.s32.totalorder 2, %s20
      // Predicated region
      $region49: #{tpu_custom_call.1} parent=5 // pred_check
        %p859 = pneg %p858
      $region50: #{tpu_custom_call.1} parent=5 // pred_check_branch
        %861 = sbr.rel (%p859) target = $region52
      $region51: #{tpu_custom_call.1} parent=5 // pred_region
        %s862 = ssub.s32 %s20, 2
        // Predicated region
        $region53: #{tpu_custom_call.1} parent=51 // pred_check
          %p863 = pneg %p121
        $region54: #{tpu_custom_call.1} parent=51 // pred_check_branch
          %865 = sbr.rel (%p863) target = $region56
        $region55: #{tpu_custom_call.1} parent=51 // pred_region
          %s866 = sand.u32 %s106, 1
          %s867 = scalar_lea.sflag [#allocation4], %s866
          %s868 = sand.u32 %s106, 1
          %s869 = smul.addr %s868, 2
          %s870 = scalar_lea.vmem [#allocation7], %s869
          %872 = dma.done %s867, 32
        $region56: #{tpu_custom_call.1} parent=51 // pred_fallthru
          _
        // Predicated region
        $region57: #{tpu_custom_call.1} parent=51 // pred_check
          %p873 = pneg %p149
        $region58: #{tpu_custom_call.1} parent=51 // pred_check_branch
          %875 = sbr.rel (%p873) target = $region60
        $region59: #{tpu_custom_call.1} parent=51 // pred_region
          %s876 = sand.u32 %s134, 1
          %s877 = scalar_lea.sflag [#allocation9], %s876
          %s878 = sand.u32 %s134, 1
          %s879 = smul.addr %s878, 2
          %s880 = scalar_lea.vmem [#allocation8], %s879
          %882 = dma.done %s877, 32
        $region60: #{tpu_custom_call.1} parent=51 // pred_fallthru
          _
      $region52: #{tpu_custom_call.1} parent=5 // pred_fallthru
        _
    $region6: #{tpu_custom_call.1} parent=1 // loop_footer
      %s24 = sadd.s32 1, %s20
    $region7: #{tpu_custom_call.1} parent=1 // loop_footer_branch
      %19 = sbr.rel target = $region3
    $region8: #{tpu_custom_call.1} parent=1 // loop_exit
      _
    %883 = vsyncpa [#allocation3], 1
    %s884 = scalar_lea.sflag [#allocation3], 1
    %885 = vsyncpa %s884, 1
    %886 = vsyncpa [#allocation6], 1
    %887 = vsyncpa [#allocation4], 1
    %s888 = scalar_lea.sflag [#allocation4], 1
    %889 = vsyncpa %s888, 1
    %890 = vsyncpa [#allocation9], 1
    %s891 = scalar_lea.sflag [#allocation9], 1
    %892 = vsyncpa %s891, 1

</llo_original>
